<compile_context>
chip_gen: v7x
topology: tpu7x:2x2x1
jax: 0.10.0
libtpu: 0.0.40
codegen_flags: <defaults>
</compile_context>

<pallas_src>
import functools

import jax
import jax.numpy as jnp
from jax import lax
from jax.experimental import pallas as pl
from jax.experimental.pallas import tpu as pltpu


_ROW_TILE_CAP = 1024          # 512-1024-row tiles already sit at ~85% of HBM roofline
_MIX_M1 = -2048144789         # 0x85EBCA6B as a wrapped int32 (murmur3 fmix constant)
_MIX_M2 = -1028477387         # 0xC2B2AE35 as a wrapped int32


def _round_up(a, b):
    return (a + b - 1) // b * b


def _sublane_multiple(*dtypes):
    # f32 -> 8 rows / vreg, bf16 -> 16, int8/fp8 -> 32.
    return max(max(8, 32 // jnp.dtype(dt).itemsize) for dt in dtypes)


def _vmem_budget_bytes():
    """Generation-aware scoped-VMEM limit (~70% of physical, capped at 100 MiB)."""
    phys = 64 * 1024 * 1024          # conservative default: v7x per-core VMEM
    try:
        cap = getattr(pltpu.get_tpu_info(), "vmem_capacity_bytes", None)
        if cap and cap >= 16 * 1024 * 1024:
            phys = int(cap)
    except Exception:                # no TPU / interpret mode: keep the safe default
        pass
    return min(int(phys * 0.70), 100 * 1024 * 1024)


def _pick_row_tile(n_rows, bytes_per_row, sublane):
    """Largest sublane-multiple row tile that fits the VMEM budget with headroom."""
    budget = _vmem_budget_bytes()
    usable = int(budget * 0.8)                        # ~20% headroom for compiler scratch
    max_rows = max(sublane, usable // max(bytes_per_row, 1))
    rt = min(max_rows, _ROW_TILE_CAP, _round_up(n_rows, sublane))
    rt = max(sublane, rt // sublane * sublane)
    return rt, budget


def _mix32(x):
    """murmur3-finalizer-flavoured int32 mixer.

    Uses only int32 mul / xor / shift / and, which lower both on Mosaic (TPU)
    and in interpret mode (unlike pltpu.prng_*).  Quality is ample for dropout.
    """
    x = x ^ (x >> 16)
    x = x * jnp.int32(_MIX_M1)
    x = x ^ (x >> 13)
    x = x * jnp.int32(_MIX_M2)
    x = x ^ (x >> 16)
    return x


# --------------------------------------------------------------------------- #
# Kernel 1: LayerNorm over the last axis (d_model)
# --------------------------------------------------------------------------- #
def _layernorm_kernel(x_ref, g_ref, b_ref, o_ref, *, eps):
    # x_ref: (ROWS, D) tile in VMEM; g_ref / b_ref: (1, D), resident across grid.
    x = x_ref[...].astype(jnp.float32)
    d = x.shape[-1]
    # Two-pass statistics: robust against catastrophic cancellation when the
    # activations have a large mean relative to their spread.
    mean = jnp.sum(x, axis=-1, keepdims=True) * jnp.float32(1.0 / d)
    xc = x - mean
    var = jnp.sum(xc * xc, axis=-1, keepdims=True) * jnp.float32(1.0 / max(d - 1, 1))
    denom = jnp.sqrt(var) + jnp.float32(eps)          # eps added to std, like the reference
    inv = pl.reciprocal(denom, approx=True)           # EUP slot
    inv = inv * (jnp.float32(2.0) - denom * inv)      # one Newton step -> near-exact
    g = g_ref[...].astype(jnp.float32)
    b = b_ref[...].astype(jnp.float32)
    o_ref[...] = (g * (xc * inv) + b).astype(o_ref.dtype)


def layer_norm(x, gamma, beta, *, eps=1e-6):
    """LayerNorm over the last axis of x (any leading dims)."""
    orig_shape = x.shape
    d = orig_shape[-1]
    x2 = x.reshape(-1, d)
    n_rows = x2.shape[0]

    isz = jnp.dtype(x.dtype).itemsize
    sub = _sublane_multiple(x.dtype)
    # double-buffered in + out blocks plus ~3 live f32 copies of the tile
    bytes_per_row = 4 * d * isz + 3 * d * 4
    rt, vmem_limit = _pick_row_tile(n_rows, bytes_per_row, sub)
    n_blocks = pl.cdiv(n_rows, rt)

    gamma2 = gamma.reshape(1, d)
    beta2 = beta.reshape(1, d)

    out = pl.pallas_call(
        functools.partial(_layernorm_kernel, eps=eps),
        out_shape=jax.ShapeDtypeStruct((n_rows, d), x.dtype),
        grid_spec=pltpu.PrefetchScalarGridSpec(
            num_scalar_prefetch=0,
            grid=(n_blocks,),
            in_specs=[
                pl.BlockSpec((rt, d), lambda i: (i, 0)),
                pl.BlockSpec((1, d), lambda i: (0, 0)),
                pl.BlockSpec((1, d), lambda i: (0, 0)),
            ],
            out_specs=pl.BlockSpec((rt, d), lambda i: (i, 0)),
        ),
        compiler_params=pltpu.CompilerParams(
            dimension_semantics=("parallel",),
            vmem_limit_bytes=vmem_limit,
        ),
    )(x2, gamma2, beta2)
    return out.reshape(orig_shape)


# --------------------------------------------------------------------------- #
# Kernel 2: fused residual add + (inverted) dropout epilogue
# --------------------------------------------------------------------------- #
def _residual_dropout_kernel(key_ref, x_ref, s_ref, o_ref, *,
                             drop_threshold, scale, apply_dropout):
    x = x_ref[...].astype(jnp.float32)
    s = s_ref[...].astype(jnp.float32)   # s cast happens here, not in the wrapper
    if apply_dropout:
        shape = x.shape
        rows = lax.broadcasted_iota(jnp.int32, shape, 0)
        cols = lax.broadcasted_iota(jnp.int32, shape, 1)
        row0 = pl.program_id(0) * jnp.int32(shape[0])
        # Global element index (wraps for huge tensors, which is fine for hashing).
        gidx = (row0 + rows) * jnp.int32(shape[1]) + cols
        h = _mix32(gidx ^ key_ref[0])
        h = _mix32(h + gidx)
        bits = jnp.bitwise_and(h, jnp.int32(0x7FFFFFFF))   # uniform in [0, 2^31)
        keep = bits >= jnp.int32(drop_threshold)           # P(keep) = 1 - p
        s = jnp.where(keep, s * jnp.float32(scale), jnp.float32(0.0))
    o_ref[...] = (x + s).astype(o_ref.dtype)


def residual_dropout_add(x, s, *, dropout_p=0.0, training=False, seed=0):
    """out = x + dropout(s) — the elementwise epilogue of SublayerConnection."""
    orig_shape = x.shape
    d = orig_shape[-1]
    x2 = x.reshape(-1, d)
    s2 = s.reshape(-1, d)                 # native dtype; cast fused into the kernel
    n_rows = x2.shape[0]

    p = float(dropout_p)
    apply_dropout = bool(training) and p > 0.0
    if apply_dropout and p >= 1.0:
        # nn.Dropout(p=1) zeroes its input, so the output is just the residual.
        return x

    sub = _sublane_multiple(x.dtype, s.dtype)
    isz_x = jnp.dtype(x.dtype).itemsize
    isz_s = jnp.dtype(s.dtype).itemsize
    # double-buffered x, s, out blocks plus ~3 live 32-bit temporaries per tile
    bytes_per_row = 2 * d * (isz_x + isz_s + isz_x) + 3 * d * 4
    rt, vmem_limit = _pick_row_tile(n_rows, bytes_per_row, sub)
    n_blocks = pl.cdiv(n_rows, rt)

    drop_threshold = min(int(round(p * float(1 << 31))), (1 << 31) - 1)
    scale = 1.0 / (1.0 - p) if apply_dropout else 1.0
    # Mix the user seed before it enters the kernel so adjacent seeds give
    # uncorrelated streams (review correctness concern).
    key = _mix32(jnp.asarray(seed, dtype=jnp.int32) ^ jnp.int32(0x3243F6A)).reshape(1)

    kernel = functools.partial(
        _residual_dropout_kernel,
        drop_threshold=drop_threshold, scale=scale, apply_dropout=apply_dropout)

    out = pl.pallas_call(
        kernel,
        out_shape=jax.ShapeDtypeStruct((n_rows, d), x.dtype),
        grid_spec=pltpu.PrefetchScalarGridSpec(
            num_scalar_prefetch=1,        # mixed dropout key lives in SMEM
            grid=(n_blocks,),
            in_specs=[
                pl.BlockSpec((rt, d), lambda i, _: (i, 0)),
                pl.BlockSpec((rt, d), lambda i, _: (i, 0)),
            ],
            out_specs=pl.BlockSpec((rt, d), lambda i, _: (i, 0)),
        ),
        compiler_params=pltpu.CompilerParams(
            dimension_semantics=("parallel",),
            vmem_limit_bytes=vmem_limit,
        ),
    )(key, x2, s2)
    return out.reshape(orig_shape)


def sublayer_connection(x, sublayer, gamma, beta, *, eps=1e-6, dropout_p=0.2,
                        training=False, dropout_seed=0):
    """SublayerConnection forward: x + dropout(sublayer(LayerNorm(x)))."""
    y = layer_norm(x, gamma, beta, eps=eps)
    # TODO(synk): `sublayer` is an arbitrary user callable (attention / FFN); it
    # runs as plain JAX between the two Pallas kernels and cannot be fused
    # generically.  See header TODO for the known-matmul fused-epilogue path.
    s = sublayer(y)
    return residual_dropout_add(x, s, dropout_p=dropout_p, training=training,
                                seed=dropout_seed)


if __name__ == "__main__":
    d_model = 512            # features / size from the module definition
    batch, seq = 2, 8
    eps = 1e-6
    p = 0.2                  # dropout from the module definition

    key = jax.random.PRNGKey(0)
    kx, kw = jax.random.split(key)
    x = jax.random.normal(kx, (batch, seq, d_model), dtype=jnp.float32)
    w = 0.02 * jax.random.normal(kw, (d_model, d_model), dtype=jnp.float32)

    # Parameters initialized exactly as the PyTorch LayerNorm: a_2=ones, b_2=zeros.
    a_2 = jnp.ones((d_model,), dtype=jnp.float32)
    b_2 = jnp.zeros((d_model,), dtype=jnp.float32)

    sublayer = lambda y: jnp.dot(y, w)   # stand-in for the attention/FFN sublayer

    # --- eval mode (dropout = identity): exact check vs pure-JAX reference ----
    out_eval = sublayer_connection(x, sublayer, a_2, b_2, eps=eps,
                                   dropout_p=p, training=False)
    out_eval = jax.block_until_ready(out_eval)

    mean = jnp.mean(x, axis=-1, keepdims=True)
    std = jnp.std(x, axis=-1, keepdims=True, ddof=1)
    y_ref = a_2 * (x - mean) / (std + eps) + b_2
    ref_eval = x + sublayer(y_ref)

    assert out_eval.shape == x.shape and out_eval.dtype == x.dtype
    assert jnp.allclose(out_eval, ref_eval, atol=2e-5, rtol=2e-5)

    # --- training mode: exercise the fused residual + dropout kernel ----------
    out_train = sublayer_connection(x, sublayer, a_2, b_2, eps=eps,
                                    dropout_p=p, training=True,
                                    dropout_seed=1234)
    out_train = jax.block_until_ready(out_train)

    s_ref = sublayer(y_ref)
    delta = out_train - x                      # s/(1-p) where kept, 0 where dropped
    cand_err = jnp.minimum(jnp.abs(delta), jnp.abs(delta - s_ref / (1.0 - p)))
    drop_frac = float(jnp.mean(jnp.abs(delta) < 1e-6))
    assert bool(jnp.all(cand_err < 1e-3)), "dropout output not of expected form"
    assert 0.05 < drop_frac < 0.45, f"implausible drop fraction: {drop_frac}"

    print("KERNEL_OK")
</pallas_src>

<mosaic_0001>
module attributes {stable_mosaic.version = 11 : i64} {
  func.func @_layernorm_kernel(%arg0: i32, %arg1: memref<16x512xf32, #tpu.memory_space<vmem>>, %arg2: memref<1x512xf32, #tpu.memory_space<vmem>>, %arg3: memref<1x512xf32, #tpu.memory_space<vmem>>, %arg4: memref<16x512xf32, #tpu.memory_space<vmem>>) attributes {dimension_semantics = [#tpu.dimension_semantics<parallel>], iteration_bounds = array<i64: 1>, scalar_prefetch = 0 : i64, scratch_operands = 0 : i64, tpu.core_type = #tpu.core_type<tc>, window_params = [{transform_indices = @transform_0, window_bounds = array<i64: 16, 512>}, {pipeline_mode = #tpu.pipeline_mode<synchronous>, transform_indices = @transform_1, window_bounds = array<i64: 1, 512>}, {pipeline_mode = #tpu.pipeline_mode<synchronous>, transform_indices = @transform_2, window_bounds = array<i64: 1, 512>}, {transform_indices = @transform_3, window_bounds = array<i64: 16, 512>}]} {
    %c0 = arith.constant 0 : index
    %c0_0 = arith.constant 0 : index
    %0 = vector.load %arg1[%c0, %c0_0] : memref<16x512xf32, #tpu.memory_space<vmem>>, vector<16x512xf32>
    %cst = arith.constant dense<0.000000e+00> : vector<16xf32>
    %1 = vector.multi_reduction <add>, %0, %cst [1] : vector<16x512xf32> to vector<16xf32>
    %2 = vector.shape_cast %1 : vector<16xf32> to vector<16x1xf32>
    %cst_1 = arith.constant 0.001953125 : f32
    %3 = vector.broadcast %cst_1 : f32 to vector<16x1xf32>
    %4 = arith.mulf %2, %3 : vector<16x1xf32>
    %5 = vector.broadcast %4 : vector<16x1xf32> to vector<16x512xf32>
    %6 = arith.subf %0, %5 : vector<16x512xf32>
    %7 = arith.mulf %6, %6 : vector<16x512xf32>
    %cst_2 = arith.constant dense<0.000000e+00> : vector<16xf32>
    %8 = vector.multi_reduction <add>, %7, %cst_2 [1] : vector<16x512xf32> to vector<16xf32>
    %9 = vector.shape_cast %8 : vector<16xf32> to vector<16x1xf32>
    %cst_3 = arith.constant 0.00195694715 : f32
    %10 = vector.broadcast %cst_3 : f32 to vector<16x1xf32>
    %11 = arith.mulf %9, %10 : vector<16x1xf32>
    %12 = math.sqrt %11 : vector<16x1xf32>
    %cst_4 = arith.constant 9.99999997E-7 : f32
    %13 = vector.broadcast %cst_4 : f32 to vector<16x1xf32>
    %14 = arith.addf %12, %13 : vector<16x1xf32>
    %15 = tpu.reciprocal %14 {approx = true} : vector<16x1xf32> -> vector<16x1xf32>
    %16 = arith.mulf %14, %15 : vector<16x1xf32>
    %cst_5 = arith.constant 2.000000e+00 : f32
    %17 = vector.broadcast %cst_5 : f32 to vector<16x1xf32>
    %18 = arith.subf %17, %16 : vector<16x1xf32>
    %19 = arith.mulf %15, %18 : vector<16x1xf32>
    %c0_6 = arith.constant 0 : index
    %c0_7 = arith.constant 0 : index
    %20 = vector.load %arg2[%c0_6, %c0_7] : memref<1x512xf32, #tpu.memory_space<vmem>>, vector<1x512xf32>
    %c0_8 = arith.constant 0 : index
    %c0_9 = arith.constant 0 : index
    %21 = vector.load %arg3[%c0_8, %c0_9] : memref<1x512xf32, #tpu.memory_space<vmem>>, vector<1x512xf32>
    %22 = vector.broadcast %19 : vector<16x1xf32> to vector<16x512xf32>
    %23 = arith.mulf %6, %22 : vector<16x512xf32>
    %24 = vector.broadcast %20 : vector<1x512xf32> to vector<16x512xf32>
    %25 = arith.mulf %24, %23 : vector<16x512xf32>
    %26 = vector.broadcast %21 : vector<1x512xf32> to vector<16x512xf32>
    %27 = arith.addf %25, %26 : vector<16x512xf32>
    %c0_10 = arith.constant 0 : index
    %c0_11 = arith.constant 0 : index
    %28 = vector.load %arg4[%c0_10, %c0_11] : memref<16x512xf32, #tpu.memory_space<vmem>>, vector<16x512xf32>
    tpu.vector_store %arg4[%c0_10, %c0_11], %27 {strides = array<i32>} : memref<16x512xf32, #tpu.memory_space<vmem>>, vector<16x512xf32>,
    return
  }
  func.func @transform_0(%arg0: i32) -> (i32, i32) {
    %c0_i32 = arith.constant 0 : i32
    %c0_i32_0 = arith.constant 0 : i32
    return %arg0, %c0_i32 : i32, i32
  }
  func.func @transform_1(%arg0: i32) -> (i32, i32) {
    %c0_i32 = arith.constant 0 : i32
    %c0_i32_0 = arith.constant 0 : i32
    %c0_i32_1 = arith.constant 0 : i32
    return %c0_i32, %c0_i32_0 : i32, i32
  }
  func.func @transform_2(%arg0: i32) -> (i32, i32) {
    %c0_i32 = arith.constant 0 : i32
    %c0_i32_0 = arith.constant 0 : i32
    %c0_i32_1 = arith.constant 0 : i32
    return %c0_i32, %c0_i32_0 : i32, i32
  }
  func.func @transform_3(%arg0: i32) -> (i32, i32) {
    %c0_i32 = arith.constant 0 : i32
    %c0_i32_0 = arith.constant 0 : i32
    return %arg0, %c0_i32 : i32, i32
  }
}

</mosaic_0001>

<llo_original>
// kernel: tpu_custom_call.1
$region0: #{tpu_custom_call.1}
  #allocation0 [shape = 'u32[]', space=smem, size = 0x4, offset = 0x4, fixed_abs, tag = 'smem constant byte address 0x4 - core index']
  #allocation1 [shape = 'u32[144,128]{1,0:T(1,128)}', space=vmem, size = 0x12000, scoped, tag = 'internal scratch']
  %s0 = inlined_call_operand.hbm [shape: f32[16,512], index: 0, kind: input, shape index: {}]
  %s1 = inlined_call_operand.hbm [shape: f32[1,512], index: 1, kind: input, shape index: {}]
  %s2 = inlined_call_operand.vmem [shape: f32[1,512], index: 2, kind: input, shape index: {}]
  %s3 = inlined_call_operand.hbm [shape: f32[16,512], index: 3, kind: output, shape index: {}]
  %s4 = sld [smem:[#allocation0]]
  $region30: #{tpu_custom_call.1} parent=0
    _
  %s6 = ssub.s32 1, %s4
  %s7 = scalar_select 0, %s6, %s4
  $region1: #{tpu_custom_call.1} parent=0
    #allocation2 [shape = 'u8[32768]{0}', space=vmem, size = 0x8000, scoped, tag = 'input window, operand 0, single buffered']
    #allocation3 [shape = 's32[1]{0}', space=sflag, size = 0x4, scoped, tag = 'scoped memory for tpu_custom_call.1']
    #allocation4 [shape = 's32[1]{0}', space=sflag, size = 0x4, scoped, tag = 'scoped memory for tpu_custom_call.1']
    #allocation5 [shape = 'u8[2048]{0}', space=vmem, size = 0x800, scoped, tag = 'input window, operand 1, single buffered']
    #allocation6 [shape = 's32[1]{0}', space=sflag, size = 0x4, scoped, tag = 'scoped memory for tpu_custom_call.1']
    #allocation7 [shape = 'u8[32768]{0}', space=vmem, size = 0x8000, scoped, tag = 'output window, operand 0, single buffered']
    %8 = vsyncpa [#allocation3], 0
    %9 = vsyncpa [#allocation6], 0
    %10 = vsyncpa [#allocation4], 0
    // Predicated region
    $region2: #{tpu_custom_call.1} parent=1 // pred_check
      _
    $region3: #{tpu_custom_call.1} parent=1 // pred_check_branch
      %12 = sbr.rel (0) target = $region5
    $region4: #{tpu_custom_call.1} parent=1 // pred_region
      %s14 = ssub.s32 1024, 1024
      %15 = vsyncadd [#allocation3], %s14
      %s16 = sshll.u32 [#allocation2], 4
      %s17 = int_to_ptr.vmem [resolvable:$true] %s16
      %22 = dma.hbm_to_vmem [thread:$0]  %s0, 1024, %s17, [#allocation3], 512, 512, 32
    $region5: #{tpu_custom_call.1} parent=1 // pred_fallthru
      _
    // Predicated region
    $region6: #{tpu_custom_call.1} parent=1 // pred_check
      _
    $region7: #{tpu_custom_call.1} parent=1 // pred_check_branch
      %24 = sbr.rel (0) target = $region9
    $region8: #{tpu_custom_call.1} parent=1 // pred_region
      %s26 = ssub.s32 64, 64
      %27 = vsyncadd [#allocation6], %s26
      %s29 = sshll.u32 [#allocation5], 4
      %s30 = int_to_ptr.vmem [resolvable:$true] %s29
      %32 = dma.hbm_to_vmem [thread:$0]  %s1, 64, %s30, [#allocation6]
    $region9: #{tpu_custom_call.1} parent=1 // pred_fallthru
      _
    // Predicated region
    $region10: #{tpu_custom_call.1} parent=1 // pred_check
      _
    $region11: #{tpu_custom_call.1} parent=1 // pred_check_branch
      %34 = sbr.rel (0) target = $region13
    $region12: #{tpu_custom_call.1} parent=1 // pred_region
      _
    $region13: #{tpu_custom_call.1} parent=1 // pred_fallthru
      _
    // Predicated region
    $region14: #{tpu_custom_call.1} parent=1 // pred_check
      _
    $region15: #{tpu_custom_call.1} parent=1 // pred_check_branch
      %36 = sbr.rel (0) target = $region17
    $region16: #{tpu_custom_call.1} parent=1 // pred_region
      %37 = dma.done [#allocation3], 1024
    $region17: #{tpu_custom_call.1} parent=1 // pred_fallthru
      _
    // Predicated region
    $region18: #{tpu_custom_call.1} parent=1 // pred_check
      _
    $region19: #{tpu_custom_call.1} parent=1 // pred_check_branch
      %39 = sbr.rel (0) target = $region21
    $region20: #{tpu_custom_call.1} parent=1 // pred_region
      %40 = dma.done [#allocation6], 64
    $region21: #{tpu_custom_call.1} parent=1 // pred_fallthru
      _
    %v41 = vld [vmem:[#allocation2] sm:$0xff]
    %v42 = vld [vmem:[#allocation2 + $0x8] sm:$0xff]
    %v43 = vld [vmem:[#allocation2 + $0x10] sm:$0xff]
    %v44 = vld [vmem:[#allocation2 + $0x18] sm:$0xff]
    %v45 = vld [vmem:[#allocation2 + $0x20] sm:$0xff]
    %v46 = vld [vmem:[#allocation2 + $0x28] sm:$0xff]
    %v47 = vld [vmem:[#allocation2 + $0x30] sm:$0xff]
    %v48 = vld [vmem:[#allocation2 + $0x38] sm:$0xff]
    %v49 = vadd.f32 %v41, %v42
    %v50 = vadd.f32 %v49, %v43
    %v51 = vadd.f32 %v50, %v44
    %52 = vadd.xlane.f32.xlu0 %v51
    %v53 = vpop.xlane.xlu0 %52
    %v54 = vadd.f32 %v45, %v46
    %v55 = vadd.f32 %v54, %v47
    %v56 = vadd.f32 %v55, %v48
    %57 = vadd.xlane.f32.xlu0 %v56
    %v58 = vpop.xlane.xlu0 %57
    %v59 = vmul.f32 %v53, 0.001953125
    %v60 = vmul.f32 %v58, 0.001953125
    %v61 = vsub.f32 %v41, %v59
    %v62 = vsub.f32 %v42, %v59
    %v63 = vsub.f32 %v43, %v59
    %v64 = vsub.f32 %v44, %v59
    %v65 = vsub.f32 %v45, %v60
    %v66 = vsub.f32 %v46, %v60
    %v67 = vsub.f32 %v47, %v60
    %v68 = vsub.f32 %v48, %v60
    %v69 = vmul.f32 %v61, %v61
    %v70 = vmul.f32 %v62, %v62
    %v71 = vmul.f32 %v63, %v63
    %v72 = vmul.f32 %v64, %v64
    %v73 = vmul.f32 %v65, %v65
    %v74 = vmul.f32 %v66, %v66
    %v75 = vmul.f32 %v67, %v67
    %v76 = vmul.f32 %v68, %v68
    %v77 = vadd.f32 %v69, %v70
    %v78 = vadd.f32 %v77, %v71
    %v79 = vadd.f32 %v78, %v72
    %80 = vadd.xlane.f32.xlu0 %v79
    %v81 = vpop.xlane.xlu0 %80
    %v82 = vadd.f32 %v73, %v74
    %v83 = vadd.f32 %v82, %v75
    %v84 = vadd.f32 %v83, %v76
    %85 = vadd.xlane.f32.xlu0 %v84
    %v86 = vpop.xlane.xlu0 %85
    %v87 = vmul.f32 %v81, 0.0019569471
    %v88 = vmul.f32 %v86, 0.0019569471
    %v89 = vrsqrt.pop %v87
    %v90 = vmul.f32 %v87, %v89
    %vm91 = vcmp.eq.f32.partialorder %v87, inf
    %v92 = vsel %vm91, %v87, %v90
    %vm93 = vcmp.eq.f32.partialorder %v87, 0.0
    %v94 = vand.u32 %v87, 2147483648
    %v95 = vsel %vm93, %v94, %v92
    %v96 = vrsqrt.pop %v88
    %v97 = vmul.f32 %v88, %v96
    %vm98 = vcmp.eq.f32.partialorder %v88, inf
    %v99 = vsel %vm98, %v88, %v97
    %vm100 = vcmp.eq.f32.partialorder %v88, 0.0
    %v101 = vand.u32 %v88, 2147483648
    %v102 = vsel %vm100, %v101, %v99
    %v103 = vadd.f32 %v95, 1e-06
    %v104 = vadd.f32 %v102, 1e-06
    %v105 = vrcp.pop %v103
    %v106 = vrcp.pop %v104
    %v107 = vmul.f32 %v103, %v105
    %v108 = vmul.f32 %v104, %v106
    %v109 = vsub.f32 2.0, %v107
    %v110 = vsub.f32 2.0, %v108
    %v111 = vmul.f32 %v105, %v109
    %v112 = vmul.f32 %v106, %v110
    %v113 = vld [vmem:[#allocation5] sm:$0xf]
    %v114 = vld [vmem:[%s2] sm:$0xf]
    %v115 = vmul.f32 %v61, %v111
    %v116 = vmul.f32 %v62, %v111
    %v117 = vmul.f32 %v63, %v111
    %v118 = vmul.f32 %v64, %v111
    %v119 = vmul.f32 %v65, %v112
    %v120 = vmul.f32 %v66, %v112
    %v121 = vmul.f32 %v67, %v112
    %v122 = vmul.f32 %v68, %v112
    %v124 = vlaneseq
    %v125 = vshrl.u32 %v124, 7
    %v126 = vsub.s32 0, %v125
    %v127 = vrot.slane %v113, %v126
    %v128 = vlaneseq
    %v129 = vshrl.u32 %v128, 7
    %v130 = vsub.s32 1, %v129
    %v131 = vrot.slane %v113, %v130
    %v132 = vlaneseq
    %v133 = vshrl.u32 %v132, 7
    %v134 = vsub.s32 2, %v133
    %v135 = vrot.slane %v113, %v134
    %v136 = vlaneseq
    %v137 = vshrl.u32 %v136, 7
    %v138 = vsub.s32 3, %v137
    %v139 = vrot.slane %v113, %v138
    %v144 = vmul.f32 %v127, %v115
    %v145 = vmul.f32 %v131, %v116
    %v146 = vmul.f32 %v135, %v117
    %v147 = vmul.f32 %v139, %v118
    %v148 = vmul.f32 %v127, %v119
    %v149 = vmul.f32 %v131, %v120
    %v150 = vmul.f32 %v135, %v121
    %v151 = vmul.f32 %v139, %v122
    %v153 = vlaneseq
    %v154 = vshrl.u32 %v153, 7
    %v155 = vsub.s32 0, %v154
    %v156 = vrot.slane %v114, %v155
    %v157 = vlaneseq
    %v158 = vshrl.u32 %v157, 7
    %v159 = vsub.s32 1, %v158
    %v160 = vrot.slane %v114, %v159
    %v161 = vlaneseq
    %v162 = vshrl.u32 %v161, 7
    %v163 = vsub.s32 2, %v162
    %v164 = vrot.slane %v114, %v163
    %v165 = vlaneseq
    %v166 = vshrl.u32 %v165, 7
    %v167 = vsub.s32 3, %v166
    %v168 = vrot.slane %v114, %v167
    %v173 = vadd.f32 %v144, %v156
    %v174 = vadd.f32 %v145, %v160
    %v175 = vadd.f32 %v146, %v164
    %v176 = vadd.f32 %v147, %v168
    %v177 = vadd.f32 %v148, %v156
    %v178 = vadd.f32 %v149, %v160
    %v179 = vadd.f32 %v150, %v164
    %v180 = vadd.f32 %v151, %v168
    %181 = vst [vmem:[#allocation7] sm:$0xff] %v173
    %182 = vst [vmem:[#allocation7 + $0x8] sm:$0xff] %v174
    %183 = vst [vmem:[#allocation7 + $0x10] sm:$0xff] %v175
    %184 = vst [vmem:[#allocation7 + $0x18] sm:$0xff] %v176
    %185 = vst [vmem:[#allocation7 + $0x20] sm:$0xff] %v177
    %186 = vst [vmem:[#allocation7 + $0x28] sm:$0xff] %v178
    %187 = vst [vmem:[#allocation7 + $0x30] sm:$0xff] %v179
    %188 = vst [vmem:[#allocation7 + $0x38] sm:$0xff] %v180
    // Predicated region
    $region22: #{tpu_custom_call.1} parent=1 // pred_check
      _
    $region23: #{tpu_custom_call.1} parent=1 // pred_check_branch
      %190 = sbr.rel (0) target = $region25
    $region24: #{tpu_custom_call.1} parent=1 // pred_region
      %s192 = ssub.s32 1024, 1024
      %193 = vsyncadd [#allocation4], %s192
      %s194 = sshll.u32 [#allocation7], 4
      %s195 = int_to_ptr.vmem [resolvable:$true] %s194
      %200 = dma.vmem_to_hbm [thread:$0]  %s195, 1024, %s3, [#allocation4], 512, 512, 32
    $region25: #{tpu_custom_call.1} parent=1 // pred_fallthru
      _
    // Predicated region
    $region26: #{tpu_custom_call.1} parent=1 // pred_check
      _
    $region27: #{tpu_custom_call.1} parent=1 // pred_check_branch
      %202 = sbr.rel (0) target = $region29
    $region28: #{tpu_custom_call.1} parent=1 // pred_region
      %203 = dma.done [#allocation4], 1024
    $region29: #{tpu_custom_call.1} parent=1 // pred_fallthru
      _
    %204 = vsyncpa [#allocation3], 1
    %205 = vsyncpa [#allocation6], 1
    %206 = vsyncpa [#allocation4], 1

</llo_original>
